<compile_context>
chip_gen: v5e
topology: v5e:2x2
jax: 0.10.0
libtpu: 0.0.40
codegen_flags: <defaults>
</compile_context>

<pallas_src>
import jax
import jax.numpy as jnp
from jax.experimental import pallas as pl
from jax.experimental.pallas import tpu as pltpu


def gru_mean_kernel(x_ref, wih_ref, whh_ref, bx_ref, bhn_ref, o_ref):
    # x_ref:   (T, tile_n, D)   compute dtype (f32 or bf16)
    # wih_ref: (D, 3H)          gate-stacked [r, z, n] input weights (transposed)
    # whh_ref: (H, 3H)          gate-stacked [r, z, n] hidden weights (transposed)
    # bx_ref:  (1, 3H)          folded biases: [b_ir+b_hr, b_iz+b_hz, b_in]  (f32)
    # bhn_ref: (1, H)           b_hn (must stay inside r * (...))            (f32)
    # o_ref:   (tile_n, H)      mean over time of hidden states
    T, tn, D = x_ref.shape
    H = o_ref.shape[1]

    whh = whh_ref[...]                                   # hoisted weight load
    b_x = bx_ref[...]                                    # (1, 3H)
    b_hn = jnp.broadcast_to(bhn_ref[...], (tn, H))       # hoisted broadcast

    # One big MXU matmul for ALL input-side gate projections (off the recurrence).
    x_all = x_ref[...].reshape(T * tn, D)
    gx = jnp.dot(x_all, wih_ref[...], preferred_element_type=jnp.float32) + b_x
    gx = gx.reshape(T, tn, 3 * H)                        # (T, tile_n, 3H) f32

    # Recurrence: T is small and static -> unrolled; h/acc carried as values.
    h = jnp.zeros((tn, H), jnp.float32)
    acc = jnp.zeros((tn, H), jnp.float32)
    for t in range(T):
        gi = gx[t]                                       # (tile_n, 3H)
        gh = jnp.dot(h.astype(whh.dtype), whh,
                     preferred_element_type=jnp.float32)  # (tile_n, 3H)
        r = jax.nn.sigmoid(gi[:, :H] + gh[:, :H])
        z = jax.nn.sigmoid(gi[:, H:2 * H] + gh[:, H:2 * H])
        n = jnp.tanh(gi[:, 2 * H:] + r * (gh[:, 2 * H:] + b_hn))
        h = (1.0 - z) * n + z * h
        acc = acc + h

    # NOTE: if the production hidden size is < 128 the output store is
    # lane-masked; with H >= 128 (typical d_model/hidden) it is lane-dense.
    o_ref[...] = (acc * (1.0 / T)).astype(o_ref.dtype)


def _round_up(v, m):
    return ((v + m - 1) // m) * m


def prepare_gru_params(wih_t, whh_t, bih, bhh):
    """Fuse per-gate [r, z, n] GRU params into MXU-friendly stacked form.

    wih_t: (3, D, H) = W_ih^T per gate; whh_t: (3, H, H) = W_hh^T per gate;
    bih, bhh: (3, 1, H).  Returns (w_ih_g (D,3H), w_hh_g (H,3H), b_x (1,3H),
    b_hn (1,H)).  b_x folds b_ih for all gates plus b_hh for r/z (plain adds);
    b_hn stays separate because it sits inside r * (h @ W_hn + b_hn).
    """
    w_ih_g = jnp.concatenate([wih_t[0], wih_t[1], wih_t[2]], axis=1)
    w_hh_g = jnp.concatenate([whh_t[0], whh_t[1], whh_t[2]], axis=1)
    b_x = jnp.concatenate([bih[0] + bhh[0], bih[1] + bhh[1], bih[2]], axis=1)
    b_hn = bhh[2]
    return w_ih_g, w_hh_g, b_x, b_hn


def patch_gru_encoder(x, w_ih_g, w_hh_g, b_x, b_hn, *, tile_n=256,
                      compute_dtype=jnp.float32,
                      vmem_budget_bytes=24 * 1024 * 1024):
    """x: (B, P, V, T, D) -> (B, P, V, H)."""
    B, P, V, T, D = x.shape
    H = b_hn.shape[1]
    N = B * P * V
    dsize = jnp.dtype(compute_dtype).itemsize
    sub = 16 if dsize == 2 else 8           # sublane granularity (bf16 packs 2/row)

    # VMEM-aware tile size: per-row bytes of the double-buffered x block plus
    # the f32 intermediates that live inside one grid step.
    per_row = (2 * T * D * dsize            # x block, double-buffered
               + T * 3 * H * 4              # precomputed input projections (f32)
               + 3 * H * 4                  # hidden-side gate matmul result
               + 2 * H * 4                  # output block, double-buffered
               + 4 * H * 4)                 # h, acc + headroom
    cap = max(sub, vmem_budget_bytes // per_row)
    tile_n = max(sub, min(tile_n, cap, _round_up(N, sub)))
    tile_n = (tile_n // sub) * sub
    n_pad = _round_up(N, tile_n)

    # Time-leading layout: (T, N, D); pad N so the grid tiles it exactly.
    xf = jnp.transpose(x.reshape(N, T, D), (1, 0, 2)).astype(compute_dtype)
    if n_pad != N:
        xf = jnp.pad(xf, ((0, 0), (0, n_pad - N), (0, 0)))

    w_ih_g = w_ih_g.astype(compute_dtype)
    w_hh_g = w_hh_g.astype(compute_dtype)
    b_x = b_x.astype(jnp.float32)
    b_hn = b_hn.astype(jnp.float32)

    weight_bytes = (D + H) * 3 * H * dsize + 4 * H * 4
    vmem_limit = int(min(max(tile_n * per_row + 2 * weight_bytes + (2 << 20),
                             32 * 1024 * 1024),
                         60 * 1024 * 1024))  # stay under v7x 64 MiB physical

    out = pl.pallas_call(
        gru_mean_kernel,
        out_shape=jax.ShapeDtypeStruct((n_pad, H), jnp.float32),
        grid_spec=pltpu.PrefetchScalarGridSpec(
            num_scalar_prefetch=0,
            grid=(n_pad // tile_n,),
            in_specs=[
                pl.BlockSpec((T, tile_n, D), lambda i: (0, i, 0)),
                pl.BlockSpec((D, 3 * H), lambda i: (0, 0)),
                pl.BlockSpec((H, 3 * H), lambda i: (0, 0)),
                pl.BlockSpec((1, 3 * H), lambda i: (0, 0)),
                pl.BlockSpec((1, H), lambda i: (0, 0)),
            ],
            out_specs=pl.BlockSpec((tile_n, H), lambda i: (i, 0)),
        ),
        compiler_params=pltpu.CompilerParams(
            dimension_semantics=("parallel",),   # megacore sharding on v7x
            vmem_limit_bytes=vmem_limit,
        ),
    )(xf, w_ih_g, w_hh_g, b_x, b_hn)

    return out[:N].reshape(B, P, V, H)


def ref_patch_gru_encoder(x, wih_t, whh_t, bih, bhh):
    """Pure-JAX reference matching the PyTorch forward (unidir, 1 layer)."""
    B, P, V, T, D = x.shape
    H = wih_t.shape[2]
    N = B * P * V
    xf = x.reshape(N, T, D).astype(jnp.float32)
    h = jnp.zeros((N, H), jnp.float32)
    acc = jnp.zeros((N, H), jnp.float32)
    for t in range(T):
        xt = xf[:, t, :]
        r = jax.nn.sigmoid(xt @ wih_t[0] + bih[0] + h @ whh_t[0] + bhh[0])
        z = jax.nn.sigmoid(xt @ wih_t[1] + bih[1] + h @ whh_t[1] + bhh[1])
        n = jnp.tanh(xt @ wih_t[2] + bih[2] + r * (h @ whh_t[2] + bhh[2]))
        h = (1.0 - z) * n + z * h
        acc = acc + h
    return (acc / T).reshape(B, P, V, H)


if __name__ == "__main__":
    # Small shapes consistent with the module's forward.
    B, P, V = 2, 4, 2          # batch, num_patch, nvars  -> N = 16
    T, D, H = 8, 16, 32        # patch_len, d_model (input_size), hidden_size

    key = jax.random.PRNGKey(0)
    kx, kwi, kwh, kbi, kbh = jax.random.split(key, 5)

    x = jax.random.normal(kx, (B, P, V, T, D), dtype=jnp.float32)

    # Deterministic GRU parameter init, mimicking PyTorch's U(-1/sqrt(H), 1/sqrt(H)).
    bound = 1.0 / (H ** 0.5)
    wih_t = jax.random.uniform(kwi, (3, D, H), jnp.float32, -bound, bound)  # W_ih^T [r,z,n]
    whh_t = jax.random.uniform(kwh, (3, H, H), jnp.float32, -bound, bound)  # W_hh^T [r,z,n]
    bih = jax.random.uniform(kbi, (3, 1, H), jnp.float32, -bound, bound)
    bhh = jax.random.uniform(kbh, (3, 1, H), jnp.float32, -bound, bound)

    w_ih_g, w_hh_g, b_x, b_hn = prepare_gru_params(wih_t, whh_t, bih, bhh)
    ref = ref_patch_gru_encoder(x, wih_t, whh_t, bih, bhh)

    # f32 path: tight check against the reference.
    out_f32 = patch_gru_encoder(x, w_ih_g, w_hh_g, b_x, b_hn,
                                compute_dtype=jnp.float32)
    out_f32 = jax.block_until_ready(out_f32)
    assert out_f32.shape == (B, P, V, H)
    assert jnp.allclose(out_f32, ref, atol=1e-4, rtol=1e-4), \
        "f32 Pallas output mismatch vs reference"

    # bf16 inputs/weights (MXU fast path), f32 accumulation & gate math.
    out_bf16 = patch_gru_encoder(x, w_ih_g, w_hh_g, b_x, b_hn,
                                 compute_dtype=jnp.bfloat16)
    out_bf16 = jax.block_until_ready(out_bf16)
    assert jnp.allclose(out_bf16, ref, atol=3e-2, rtol=3e-2), \
        "bf16 Pallas output mismatch vs reference"

    print("KERNEL_OK")
</pallas_src>

<mosaic_0001>
module attributes {stable_mosaic.version = 11 : i64} {
  func.func @gru_mean_kernel(%arg0: i32, %arg1: memref<8x16x16xf32, #tpu.memory_space<vmem>>, %arg2: memref<16x96xf32, #tpu.memory_space<vmem>>, %arg3: memref<32x96xf32, #tpu.memory_space<vmem>>, %arg4: memref<1x96xf32, #tpu.memory_space<vmem>>, %arg5: memref<1x32xf32, #tpu.memory_space<vmem>>, %arg6: memref<16x32xf32, #tpu.memory_space<vmem>>) attributes {dimension_semantics = [#tpu.dimension_semantics<parallel>], iteration_bounds = array<i64: 1>, scalar_prefetch = 0 : i64, scratch_operands = 0 : i64, tpu.core_type = #tpu.core_type<tc>, window_params = [{transform_indices = @transform_0, window_bounds = array<i64: 8, 16, 16>}, {pipeline_mode = #tpu.pipeline_mode<synchronous>, transform_indices = @transform_1, window_bounds = array<i64: 16, 96>}, {pipeline_mode = #tpu.pipeline_mode<synchronous>, transform_indices = @transform_2, window_bounds = array<i64: 32, 96>}, {pipeline_mode = #tpu.pipeline_mode<synchronous>, transform_indices = @transform_3, window_bounds = array<i64: 1, 96>}, {pipeline_mode = #tpu.pipeline_mode<synchronous>, transform_indices = @transform_4, window_bounds = array<i64: 1, 32>}, {transform_indices = @transform_5, window_bounds = array<i64: 16, 32>}]} {
    %c0 = arith.constant 0 : index
    %c0_0 = arith.constant 0 : index
    %0 = vector.load %arg3[%c0, %c0_0] : memref<32x96xf32, #tpu.memory_space<vmem>>, vector<32x96xf32>
    %c0_1 = arith.constant 0 : index
    %c0_2 = arith.constant 0 : index
    %1 = vector.load %arg4[%c0_1, %c0_2] : memref<1x96xf32, #tpu.memory_space<vmem>>, vector<1x96xf32>
    %c0_3 = arith.constant 0 : index
    %c0_4 = arith.constant 0 : index
    %2 = vector.load %arg5[%c0_3, %c0_4] : memref<1x32xf32, #tpu.memory_space<vmem>>, vector<1x32xf32>
    %3 = vector.shape_cast %2 : vector<1x32xf32> to vector<1x32xf32>
    %4 = vector.broadcast %3 : vector<1x32xf32> to vector<16x32xf32>
    %c0_5 = arith.constant 0 : index
    %c0_6 = arith.constant 0 : index
    %c0_7 = arith.constant 0 : index
    %5 = vector.load %arg1[%c0_5, %c0_6, %c0_7] : memref<8x16x16xf32, #tpu.memory_space<vmem>>, vector<8x16x16xf32>
    %6 = vector.shape_cast %5 : vector<8x16x16xf32> to vector<128x16xf32>
    %c0_8 = arith.constant 0 : index
    %c0_9 = arith.constant 0 : index
    %7 = vector.load %arg2[%c0_8, %c0_9] : memref<16x96xf32, #tpu.memory_space<vmem>>, vector<16x96xf32>
    %cst = arith.constant dense<0.000000e+00> : vector<128x96xf32>
    %8 = tpu.matmul %6, %7, %cst {dimension_numbers = #tpu.dot_dimension_numbers<[1], [0], [0], [1], [0, 0, 1, 1], [], []>} : vector<128x16xf32>, vector<16x96xf32>, vector<128x96xf32> -> vector<128x96xf32>
    %9 = vector.broadcast %1 : vector<1x96xf32> to vector<128x96xf32>
    %10 = arith.addf %8, %9 : vector<128x96xf32>
    %11 = vector.shape_cast %10 : vector<128x96xf32> to vector<8x16x96xf32>
    %cst_10 = arith.constant 0.000000e+00 : f32
    %12 = vector.broadcast %cst_10 : f32 to vector<16x32xf32>
    %cst_11 = arith.constant 0.000000e+00 : f32
    %13 = vector.broadcast %cst_11 : f32 to vector<16x32xf32>
    %14 = vector.extract_strided_slice %11 {offsets = [0, 0, 0], sizes = [1, 16, 96], strides = [1, 1, 1]} : vector<8x16x96xf32> to vector<1x16x96xf32>
    %15 = vector.shape_cast %14 : vector<1x16x96xf32> to vector<16x96xf32>
    %cst_12 = arith.constant dense<0.000000e+00> : vector<16x96xf32>
    %16 = tpu.matmul %12, %0, %cst_12 {dimension_numbers = #tpu.dot_dimension_numbers<[1], [0], [0], [1], [0, 0, 1, 1], [], []>} : vector<16x32xf32>, vector<32x96xf32>, vector<16x96xf32> -> vector<16x96xf32>
    %17 = vector.extract_strided_slice %15 {offsets = [0, 0], sizes = [16, 32], strides = [1, 1]} : vector<16x96xf32> to vector<16x32xf32>
    %18 = vector.extract_strided_slice %16 {offsets = [0, 0], sizes = [16, 32], strides = [1, 1]} : vector<16x96xf32> to vector<16x32xf32>
    %19 = arith.addf %17, %18 : vector<16x32xf32>
    %20 = arith.negf %19 : vector<16x32xf32>
    %21 = math.exp %20 : vector<16x32xf32>
    %cst_13 = arith.constant 1.000000e+00 : f32
    %22 = vector.broadcast %cst_13 : f32 to vector<16x32xf32>
    %23 = arith.addf %22, %21 : vector<16x32xf32>
    %24 = arith.divf %22, %23 : vector<16x32xf32>
    %25 = vector.extract_strided_slice %15 {offsets = [0, 32], sizes = [16, 32], strides = [1, 1]} : vector<16x96xf32> to vector<16x32xf32>
    %26 = vector.extract_strided_slice %16 {offsets = [0, 32], sizes = [16, 32], strides = [1, 1]} : vector<16x96xf32> to vector<16x32xf32>
    %27 = arith.addf %25, %26 : vector<16x32xf32>
    %28 = arith.negf %27 : vector<16x32xf32>
    %29 = math.exp %28 : vector<16x32xf32>
    %cst_14 = arith.constant 1.000000e+00 : f32
    %30 = vector.broadcast %cst_14 : f32 to vector<16x32xf32>
    %31 = arith.addf %30, %29 : vector<16x32xf32>
    %32 = arith.divf %30, %31 : vector<16x32xf32>
    %33 = vector.extract_strided_slice %15 {offsets = [0, 64], sizes = [16, 32], strides = [1, 1]} : vector<16x96xf32> to vector<16x32xf32>
    %34 = vector.extract_strided_slice %16 {offsets = [0, 64], sizes = [16, 32], strides = [1, 1]} : vector<16x96xf32> to vector<16x32xf32>
    %35 = arith.addf %34, %4 : vector<16x32xf32>
    %36 = arith.mulf %24, %35 : vector<16x32xf32>
    %37 = arith.addf %33, %36 : vector<16x32xf32>
    %38 = math.tanh %37 : vector<16x32xf32>
    %cst_15 = arith.constant 1.000000e+00 : f32
    %39 = vector.broadcast %cst_15 : f32 to vector<16x32xf32>
    %40 = arith.subf %39, %32 : vector<16x32xf32>
    %41 = arith.mulf %40, %38 : vector<16x32xf32>
    %42 = arith.mulf %32, %12 : vector<16x32xf32>
    %43 = arith.addf %41, %42 : vector<16x32xf32>
    %44 = arith.addf %13, %43 : vector<16x32xf32>
    %45 = vector.extract_strided_slice %11 {offsets = [1, 0, 0], sizes = [1, 16, 96], strides = [1, 1, 1]} : vector<8x16x96xf32> to vector<1x16x96xf32>
    %46 = vector.shape_cast %45 : vector<1x16x96xf32> to vector<16x96xf32>
    %cst_16 = arith.constant dense<0.000000e+00> : vector<16x96xf32>
    %47 = tpu.matmul %43, %0, %cst_16 {dimension_numbers = #tpu.dot_dimension_numbers<[1], [0], [0], [1], [0, 0, 1, 1], [], []>} : vector<16x32xf32>, vector<32x96xf32>, vector<16x96xf32> -> vector<16x96xf32>
    %48 = vector.extract_strided_slice %46 {offsets = [0, 0], sizes = [16, 32], strides = [1, 1]} : vector<16x96xf32> to vector<16x32xf32>
    %49 = vector.extract_strided_slice %47 {offsets = [0, 0], sizes = [16, 32], strides = [1, 1]} : vector<16x96xf32> to vector<16x32xf32>
    %50 = arith.addf %48, %49 : vector<16x32xf32>
    %51 = arith.negf %50 : vector<16x32xf32>
    %52 = math.exp %51 : vector<16x32xf32>
    %cst_17 = arith.constant 1.000000e+00 : f32
    %53 = vector.broadcast %cst_17 : f32 to vector<16x32xf32>
    %54 = arith.addf %53, %52 : vector<16x32xf32>
    %55 = arith.divf %53, %54 : vector<16x32xf32>
    %56 = vector.extract_strided_slice %46 {offsets = [0, 32], sizes = [16, 32], strides = [1, 1]} : vector<16x96xf32> to vector<16x32xf32>
    %57 = vector.extract_strided_slice %47 {offsets = [0, 32], sizes = [16, 32], strides = [1, 1]} : vector<16x96xf32> to vector<16x32xf32>
    %58 = arith.addf %56, %57 : vector<16x32xf32>
    %59 = arith.negf %58 : vector<16x32xf32>
    %60 = math.exp %59 : vector<16x32xf32>
    %cst_18 = arith.constant 1.000000e+00 : f32
    %61 = vector.broadcast %cst_18 : f32 to vector<16x32xf32>
    %62 = arith.addf %61, %60 : vector<16x32xf32>
    %63 = arith.divf %61, %62 : vector<16x32xf32>
    %64 = vector.extract_strided_slice %46 {offsets = [0, 64], sizes = [16, 32], strides = [1, 1]} : vector<16x96xf32> to vector<16x32xf32>
    %65 = vector.extract_strided_slice %47 {offsets = [0, 64], sizes = [16, 32], strides = [1, 1]} : vector<16x96xf32> to vector<16x32xf32>
    %66 = arith.addf %65, %4 : vector<16x32xf32>
    %67 = arith.mulf %55, %66 : vector<16x32xf32>
    %68 = arith.addf %64, %67 : vector<16x32xf32>
    %69 = math.tanh %68 : vector<16x32xf32>
    %cst_19 = arith.constant 1.000000e+00 : f32
    %70 = vector.broadcast %cst_19 : f32 to vector<16x32xf32>
    %71 = arith.subf %70, %63 : vector<16x32xf32>
    %72 = arith.mulf %71, %69 : vector<16x32xf32>
    %73 = arith.mulf %63, %43 : vector<16x32xf32>
    %74 = arith.addf %72, %73 : vector<16x32xf32>
    %75 = arith.addf %44, %74 : vector<16x32xf32>
    %76 = vector.extract_strided_slice %11 {offsets = [2, 0, 0], sizes = [1, 16, 96], strides = [1, 1, 1]} : vector<8x16x96xf32> to vector<1x16x96xf32>
    %77 = vector.shape_cast %76 : vector<1x16x96xf32> to vector<16x96xf32>
    %cst_20 = arith.constant dense<0.000000e+00> : vector<16x96xf32>
    %78 = tpu.matmul %74, %0, %cst_20 {dimension_numbers = #tpu.dot_dimension_numbers<[1], [0], [0], [1], [0, 0, 1, 1], [], []>} : vector<16x32xf32>, vector<32x96xf32>, vector<16x96xf32> -> vector<16x96xf32>
    %79 = vector.extract_strided_slice %77 {offsets = [0, 0], sizes = [16, 32], strides = [1, 1]} : vector<16x96xf32> to vector<16x32xf32>
    %80 = vector.extract_strided_slice %78 {offsets = [0, 0], sizes = [16, 32], strides = [1, 1]} : vector<16x96xf32> to vector<16x32xf32>
    %81 = arith.addf %79, %80 : vector<16x32xf32>
    %82 = arith.negf %81 : vector<16x32xf32>
    %83 = math.exp %82 : vector<16x32xf32>
    %cst_21 = arith.constant 1.000000e+00 : f32
    %84 = vector.broadcast %cst_21 : f32 to vector<16x32xf32>
    %85 = arith.addf %84, %83 : vector<16x32xf32>
    %86 = arith.divf %84, %85 : vector<16x32xf32>
    %87 = vector.extract_strided_slice %77 {offsets = [0, 32], sizes = [16, 32], strides = [1, 1]} : vector<16x96xf32> to vector<16x32xf32>
    %88 = vector.extract_strided_slice %78 {offsets = [0, 32], sizes = [16, 32], strides = [1, 1]} : vector<16x96xf32> to vector<16x32xf32>
    %89 = arith.addf %87, %88 : vector<16x32xf32>
    %90 = arith.negf %89 : vector<16x32xf32>
    %91 = math.exp %90 : vector<16x32xf32>
    %cst_22 = arith.constant 1.000000e+00 : f32
    %92 = vector.broadcast %cst_22 : f32 to vector<16x32xf32>
    %93 = arith.addf %92, %91 : vector<16x32xf32>
    %94 = arith.divf %92, %93 : vector<16x32xf32>
    %95 = vector.extract_strided_slice %77 {offsets = [0, 64], sizes = [16, 32], strides = [1, 1]} : vector<16x96xf32> to vector<16x32xf32>
    %96 = vector.extract_strided_slice %78 {offsets = [0, 64], sizes = [16, 32], strides = [1, 1]} : vector<16x96xf32> to vector<16x32xf32>
    %97 = arith.addf %96, %4 : vector<16x32xf32>
    %98 = arith.mulf %86, %97 : vector<16x32xf32>
    %99 = arith.addf %95, %98 : vector<16x32xf32>
    %100 = math.tanh %99 : vector<16x32xf32>
    %cst_23 = arith.constant 1.000000e+00 : f32
    %101 = vector.broadcast %cst_23 : f32 to vector<16x32xf32>
    %102 = arith.subf %101, %94 : vector<16x32xf32>
    %103 = arith.mulf %102, %100 : vector<16x32xf32>
    %104 = arith.mulf %94, %74 : vector<16x32xf32>
    %105 = arith.addf %103, %104 : vector<16x32xf32>
    %106 = arith.addf %75, %105 : vector<16x32xf32>
    %107 = vector.extract_strided_slice %11 {offsets = [3, 0, 0], sizes = [1, 16, 96], strides = [1, 1, 1]} : vector<8x16x96xf32> to vector<1x16x96xf32>
    %108 = vector.shape_cast %107 : vector<1x16x96xf32> to vector<16x96xf32>
    %cst_24 = arith.constant dense<0.000000e+00> : vector<16x96xf32>
    %109 = tpu.matmul %105, %0, %cst_24 {dimension_numbers = #tpu.dot_dimension_numbers<[1], [0], [0], [1], [0, 0, 1, 1], [], []>} : vector<16x32xf32>, vector<32x96xf32>, vector<16x96xf32> -> vector<16x96xf32>
    %110 = vector.extract_strided_slice %108 {offsets = [0, 0], sizes = [16, 32], strides = [1, 1]} : vector<16x96xf32> to vector<16x32xf32>
    %111 = vector.extract_strided_slice %109 {offsets = [0, 0], sizes = [16, 32], strides = [1, 1]} : vector<16x96xf32> to vector<16x32xf32>
    %112 = arith.addf %110, %111 : vector<16x32xf32>
    %113 = arith.negf %112 : vector<16x32xf32>
    %114 = math.exp %113 : vector<16x32xf32>
    %cst_25 = arith.constant 1.000000e+00 : f32
    %115 = vector.broadcast %cst_25 : f32 to vector<16x32xf32>
    %116 = arith.addf %115, %114 : vector<16x32xf32>
    %117 = arith.divf %115, %116 : vector<16x32xf32>
    %118 = vector.extract_strided_slice %108 {offsets = [0, 32], sizes = [16, 32], strides = [1, 1]} : vector<16x96xf32> to vector<16x32xf32>
    %119 = vector.extract_strided_slice %109 {offsets = [0, 32], sizes = [16, 32], strides = [1, 1]} : vector<16x96xf32> to vector<16x32xf32>
    %120 = arith.addf %118, %119 : vector<16x32xf32>
    %121 = arith.negf %120 : vector<16x32xf32>
    %122 = math.exp %121 : vector<16x32xf32>
    %cst_26 = arith.constant 1.000000e+00 : f32
    %123 = vector.broadcast %cst_26 : f32 to vector<16x32xf32>
    %124 = arith.addf %123, %122 : vector<16x32xf32>
    %125 = arith.divf %123, %124 : vector<16x32xf32>
    %126 = vector.extract_strided_slice %108 {offsets = [0, 64], sizes = [16, 32], strides = [1, 1]} : vector<16x96xf32> to vector<16x32xf32>
    %127 = vector.extract_strided_slice %109 {offsets = [0, 64], sizes = [16, 32], strides = [1, 1]} : vector<16x96xf32> to vector<16x32xf32>
    %128 = arith.addf %127, %4 : vector<16x32xf32>
    %129 = arith.mulf %117, %128 : vector<16x32xf32>
    %130 = arith.addf %126, %129 : vector<16x32xf32>
    %131 = math.tanh %130 : vector<16x32xf32>
    %cst_27 = arith.constant 1.000000e+00 : f32
    %132 = vector.broadcast %cst_27 : f32 to vector<16x32xf32>
    %133 = arith.subf %132, %125 : vector<16x32xf32>
    %134 = arith.mulf %133, %131 : vector<16x32xf32>
    %135 = arith.mulf %125, %105 : vector<16x32xf32>
    %136 = arith.addf %134, %135 : vector<16x32xf32>
    %137 = arith.addf %106, %136 : vector<16x32xf32>
    %138 = vector.extract_strided_slice %11 {offsets = [4, 0, 0], sizes = [1, 16, 96], strides = [1, 1, 1]} : vector<8x16x96xf32> to vector<1x16x96xf32>
    %139 = vector.shape_cast %138 : vector<1x16x96xf32> to vector<16x96xf32>
    %cst_28 = arith.constant dense<0.000000e+00> : vector<16x96xf32>
    %140 = tpu.matmul %136, %0, %cst_28 {dimension_numbers = #tpu.dot_dimension_numbers<[1], [0], [0], [1], [0, 0, 1, 1], [], []>} : vector<16x32xf32>, vector<32x96xf32>, vector<16x96xf32> -> vector<16x96xf32>
    %141 = vector.extract_strided_slice %139 {offsets = [0, 0], sizes = [16, 32], strides = [1, 1]} : vector<16x96xf32> to vector<16x32xf32>
    %142 = vector.extract_strided_slice %140 {offsets = [0, 0], sizes = [16, 32], strides = [1, 1]} : vector<16x96xf32> to vector<16x32xf32>
    %143 = arith.addf %141, %142 : vector<16x32xf32>
    %144 = arith.negf %143 : vector<16x32xf32>
    %145 = math.exp %144 : vector<16x32xf32>
    %cst_29 = arith.constant 1.000000e+00 : f32
    %146 = vector.broadcast %cst_29 : f32 to vector<16x32xf32>
    %147 = arith.addf %146, %145 : vector<16x32xf32>
    %148 = arith.divf %146, %147 : vector<16x32xf32>
    %149 = vector.extract_strided_slice %139 {offsets = [0, 32], sizes = [16, 32], strides = [1, 1]} : vector<16x96xf32> to vector<16x32xf32>
    %150 = vector.extract_strided_slice %140 {offsets = [0, 32], sizes = [16, 32], strides = [1, 1]} : vector<16x96xf32> to vector<16x32xf32>
    %151 = arith.addf %149, %150 : vector<16x32xf32>
    %152 = arith.negf %151 : vector<16x32xf32>
    %153 = math.exp %152 : vector<16x32xf32>
    %cst_30 = arith.constant 1.000000e+00 : f32
    %154 = vector.broadcast %cst_30 : f32 to vector<16x32xf32>
    %155 = arith.addf %154, %153 : vector<16x32xf32>
    %156 = arith.divf %154, %155 : vector<16x32xf32>
    %157 = vector.extract_strided_slice %139 {offsets = [0, 64], sizes = [16, 32], strides = [1, 1]} : vector<16x96xf32> to vector<16x32xf32>
    %158 = vector.extract_strided_slice %140 {offsets = [0, 64], sizes = [16, 32], strides = [1, 1]} : vector<16x96xf32> to vector<16x32xf32>
    %159 = arith.addf %158, %4 : vector<16x32xf32>
    %160 = arith.mulf %148, %159 : vector<16x32xf32>
    %161 = arith.addf %157, %160 : vector<16x32xf32>
    %162 = math.tanh %161 : vector<16x32xf32>
    %cst_31 = arith.constant 1.000000e+00 : f32
    %163 = vector.broadcast %cst_31 : f32 to vector<16x32xf32>
    %164 = arith.subf %163, %156 : vector<16x32xf32>
    %165 = arith.mulf %164, %162 : vector<16x32xf32>
    %166 = arith.mulf %156, %136 : vector<16x32xf32>
    %167 = arith.addf %165, %166 : vector<16x32xf32>
    %168 = arith.addf %137, %167 : vector<16x32xf32>
    %169 = vector.extract_strided_slice %11 {offsets = [5, 0, 0], sizes = [1, 16, 96], strides = [1, 1, 1]} : vector<8x16x96xf32> to vector<1x16x96xf32>
    %170 = vector.shape_cast %169 : vector<1x16x96xf32> to vector<16x96xf32>
    %cst_32 = arith.constant dense<0.000000e+00> : vector<16x96xf32>
    %171 = tpu.matmul %167, %0, %cst_32 {dimension_numbers = #tpu.dot_dimension_numbers<[1], [0], [0], [1], [0, 0, 1, 1], [], []>} : vector<16x32xf32>, vector<32x96xf32>, vector<16x96xf32> -> vector<16x96xf32>
    %172 = vector.extract_strided_slice %170 {offsets = [0, 0], sizes = [16, 32], strides = [1, 1]} : vector<16x96xf32> to vector<16x32xf32>
    %173 = vector.extract_strided_slice %171 {offsets = [0, 0], sizes = [16, 32], strides = [1, 1]} : vector<16x96xf32> to vector<16x32xf32>
    %174 = arith.addf %172, %173 : vector<16x32xf32>
    %175 = arith.negf %174 : vector<16x32xf32>
    %176 = math.exp %175 : vector<16x32xf32>
    %cst_33 = arith.constant 1.000000e+00 : f32
    %177 = vector.broadcast %cst_33 : f32 to vector<16x32xf32>
    %178 = arith.addf %177, %176 : vector<16x32xf32>
    %179 = arith.divf %177, %178 : vector<16x32xf32>
    %180 = vector.extract_strided_slice %170 {offsets = [0, 32], sizes = [16, 32], strides = [1, 1]} : vector<16x96xf32> to vector<16x32xf32>
    %181 = vector.extract_strided_slice %171 {offsets = [0, 32], sizes = [16, 32], strides = [1, 1]} : vector<16x96xf32> to vector<16x32xf32>
    %182 = arith.addf %180, %181 : vector<16x32xf32>
    %183 = arith.negf %182 : vector<16x32xf32>
    %184 = math.exp %183 : vector<16x32xf32>
    %cst_34 = arith.constant 1.000000e+00 : f32
    %185 = vector.broadcast %cst_34 : f32 to vector<16x32xf32>
    %186 = arith.addf %185, %184 : vector<16x32xf32>
    %187 = arith.divf %185, %186 : vector<16x32xf32>
    %188 = vector.extract_strided_slice %170 {offsets = [0, 64], sizes = [16, 32], strides = [1, 1]} : vector<16x96xf32> to vector<16x32xf32>
    %189 = vector.extract_strided_slice %171 {offsets = [0, 64], sizes = [16, 32], strides = [1, 1]} : vector<16x96xf32> to vector<16x32xf32>
    %190 = arith.addf %189, %4 : vector<16x32xf32>
    %191 = arith.mulf %179, %190 : vector<16x32xf32>
    %192 = arith.addf %188, %191 : vector<16x32xf32>
    %193 = math.tanh %192 : vector<16x32xf32>
    %cst_35 = arith.constant 1.000000e+00 : f32
    %194 = vector.broadcast %cst_35 : f32 to vector<16x32xf32>
    %195 = arith.subf %194, %187 : vector<16x32xf32>
    %196 = arith.mulf %195, %193 : vector<16x32xf32>
    %197 = arith.mulf %187, %167 : vector<16x32xf32>
    %198 = arith.addf %196, %197 : vector<16x32xf32>
    %199 = arith.addf %168, %198 : vector<16x32xf32>
    %200 = vector.extract_strided_slice %11 {offsets = [6, 0, 0], sizes = [1, 16, 96], strides = [1, 1, 1]} : vector<8x16x96xf32> to vector<1x16x96xf32>
    %201 = vector.shape_cast %200 : vector<1x16x96xf32> to vector<16x96xf32>
    %cst_36 = arith.constant dense<0.000000e+00> : vector<16x96xf32>
    %202 = tpu.matmul %198, %0, %cst_36 {dimension_numbers = #tpu.dot_dimension_numbers<[1], [0], [0], [1], [0, 0, 1, 1], [], []>} : vector<16x32xf32>, vector<32x96xf32>, vector<16x96xf32> -> vector<16x96xf32>
    %203 = vector.extract_strided_slice %201 {offsets = [0, 0], sizes = [16, 32], strides = [1, 1]} : vector<16x96xf32> to vector<16x32xf32>
    %204 = vector.extract_strided_slice %202 {offsets = [0, 0], sizes = [16, 32], strides = [1, 1]} : vector<16x96xf32> to vector<16x32xf32>
    %205 = arith.addf %203, %204 : vector<16x32xf32>
    %206 = arith.negf %205 : vector<16x32xf32>
    %207 = math.exp %206 : vector<16x32xf32>
    %cst_37 = arith.constant 1.000000e+00 : f32
    %208 = vector.broadcast %cst_37 : f32 to vector<16x32xf32>
    %209 = arith.addf %208, %207 : vector<16x32xf32>
    %210 = arith.divf %208, %209 : vector<16x32xf32>
    %211 = vector.extract_strided_slice %201 {offsets = [0, 32], sizes = [16, 32], strides = [1, 1]} : vector<16x96xf32> to vector<16x32xf32>
    %212 = vector.extract_strided_slice %202 {offsets = [0, 32], sizes = [16, 32], strides = [1, 1]} : vector<16x96xf32> to vector<16x32xf32>
    %213 = arith.addf %211, %212 : vector<16x32xf32>
    %214 = arith.negf %213 : vector<16x32xf32>
    %215 = math.exp %214 : vector<16x32xf32>
    %cst_38 = arith.constant 1.000000e+00 : f32
    %216 = vector.broadcast %cst_38 : f32 to vector<16x32xf32>
    %217 = arith.addf %216, %215 : vector<16x32xf32>
    %218 = arith.divf %216, %217 : vector<16x32xf32>
    %219 = vector.extract_strided_slice %201 {offsets = [0, 64], sizes = [16, 32], strides = [1, 1]} : vector<16x96xf32> to vector<16x32xf32>
    %220 = vector.extract_strided_slice %202 {offsets = [0, 64], sizes = [16, 32], strides = [1, 1]} : vector<16x96xf32> to vector<16x32xf32>
    %221 = arith.addf %220, %4 : vector<16x32xf32>
    %222 = arith.mulf %210, %221 : vector<16x32xf32>
    %223 = arith.addf %219, %222 : vector<16x32xf32>
    %224 = math.tanh %223 : vector<16x32xf32>
    %cst_39 = arith.constant 1.000000e+00 : f32
    %225 = vector.broadcast %cst_39 : f32 to vector<16x32xf32>
    %226 = arith.subf %225, %218 : vector<16x32xf32>
    %227 = arith.mulf %226, %224 : vector<16x32xf32>
    %228 = arith.mulf %218, %198 : vector<16x32xf32>
    %229 = arith.addf %227, %228 : vector<16x32xf32>
    %230 = arith.addf %199, %229 : vector<16x32xf32>
    %231 = vector.extract_strided_slice %11 {offsets = [7, 0, 0], sizes = [1, 16, 96], strides = [1, 1, 1]} : vector<8x16x96xf32> to vector<1x16x96xf32>
    %232 = vector.shape_cast %231 : vector<1x16x96xf32> to vector<16x96xf32>
    %cst_40 = arith.constant dense<0.000000e+00> : vector<16x96xf32>
    %233 = tpu.matmul %229, %0, %cst_40 {dimension_numbers = #tpu.dot_dimension_numbers<[1], [0], [0], [1], [0, 0, 1, 1], [], []>} : vector<16x32xf32>, vector<32x96xf32>, vector<16x96xf32> -> vector<16x96xf32>
    %234 = vector.extract_strided_slice %232 {offsets = [0, 0], sizes = [16, 32], strides = [1, 1]} : vector<16x96xf32> to vector<16x32xf32>
    %235 = vector.extract_strided_slice %233 {offsets = [0, 0], sizes = [16, 32], strides = [1, 1]} : vector<16x96xf32> to vector<16x32xf32>
    %236 = arith.addf %234, %235 : vector<16x32xf32>
    %237 = arith.negf %236 : vector<16x32xf32>
    %238 = math.exp %237 : vector<16x32xf32>
    %cst_41 = arith.constant 1.000000e+00 : f32
    %239 = vector.broadcast %cst_41 : f32 to vector<16x32xf32>
    %240 = arith.addf %239, %238 : vector<16x32xf32>
    %241 = arith.divf %239, %240 : vector<16x32xf32>
    %242 = vector.extract_strided_slice %232 {offsets = [0, 32], sizes = [16, 32], strides = [1, 1]} : vector<16x96xf32> to vector<16x32xf32>
    %243 = vector.extract_strided_slice %233 {offsets = [0, 32], sizes = [16, 32], strides = [1, 1]} : vector<16x96xf32> to vector<16x32xf32>
    %244 = arith.addf %242, %243 : vector<16x32xf32>
    %245 = arith.negf %244 : vector<16x32xf32>
    %246 = math.exp %245 : vector<16x32xf32>
    %cst_42 = arith.constant 1.000000e+00 : f32
    %247 = vector.broadcast %cst_42 : f32 to vector<16x32xf32>
    %248 = arith.addf %247, %246 : vector<16x32xf32>
    %249 = arith.divf %247, %248 : vector<16x32xf32>
    %250 = vector.extract_strided_slice %232 {offsets = [0, 64], sizes = [16, 32], strides = [1, 1]} : vector<16x96xf32> to vector<16x32xf32>
    %251 = vector.extract_strided_slice %233 {offsets = [0, 64], sizes = [16, 32], strides = [1, 1]} : vector<16x96xf32> to vector<16x32xf32>
    %252 = arith.addf %251, %4 : vector<16x32xf32>
    %253 = arith.mulf %241, %252 : vector<16x32xf32>
    %254 = arith.addf %250, %253 : vector<16x32xf32>
    %255 = math.tanh %254 : vector<16x32xf32>
    %cst_43 = arith.constant 1.000000e+00 : f32
    %256 = vector.broadcast %cst_43 : f32 to vector<16x32xf32>
    %257 = arith.subf %256, %249 : vector<16x32xf32>
    %258 = arith.mulf %257, %255 : vector<16x32xf32>
    %259 = arith.mulf %249, %229 : vector<16x32xf32>
    %260 = arith.addf %258, %259 : vector<16x32xf32>
    %261 = arith.addf %230, %260 : vector<16x32xf32>
    %cst_44 = arith.constant 1.250000e-01 : f32
    %262 = vector.broadcast %cst_44 : f32 to vector<16x32xf32>
    %263 = arith.mulf %261, %262 : vector<16x32xf32>
    %c0_45 = arith.constant 0 : index
    %c0_46 = arith.constant 0 : index
    %264 = vector.load %arg6[%c0_45, %c0_46] : memref<16x32xf32, #tpu.memory_space<vmem>>, vector<16x32xf32>
    tpu.vector_store %arg6[%c0_45, %c0_46], %263 {strides = array<i32>} : memref<16x32xf32, #tpu.memory_space<vmem>>, vector<16x32xf32>,
    return
  }
  func.func @transform_0(%arg0: i32) -> (i32, i32, i32) {
    %c0_i32 = arith.constant 0 : i32
    %c0_i32_0 = arith.constant 0 : i32
    %c0_i32_1 = arith.constant 0 : i32
    return %c0_i32, %arg0, %c0_i32_0 : i32, i32, i32
  }
  func.func @transform_1(%arg0: i32) -> (i32, i32) {
    %c0_i32 = arith.constant 0 : i32
    %c0_i32_0 = arith.constant 0 : i32
    %c0_i32_1 = arith.constant 0 : i32
    return %c0_i32, %c0_i32_0 : i32, i32
  }
  func.func @transform_2(%arg0: i32) -> (i32, i32) {
    %c0_i32 = arith.constant 0 : i32
    %c0_i32_0 = arith.constant 0 : i32
    %c0_i32_1 = arith.constant 0 : i32
    return %c0_i32, %c0_i32_0 : i32, i32
  }
  func.func @transform_3(%arg0: i32) -> (i32, i32) {
    %c0_i32 = arith.constant 0 : i32
    %c0_i32_0 = arith.constant 0 : i32
    %c0_i32_1 = arith.constant 0 : i32
    return %c0_i32, %c0_i32_0 : i32, i32
  }
  func.func @transform_4(%arg0: i32) -> (i32, i32) {
    %c0_i32 = arith.constant 0 : i32
    %c0_i32_0 = arith.constant 0 : i32
    %c0_i32_1 = arith.constant 0 : i32
    return %c0_i32, %c0_i32_0 : i32, i32
  }
  func.func @transform_5(%arg0: i32) -> (i32, i32) {
    %c0_i32 = arith.constant 0 : i32
    %c0_i32_0 = arith.constant 0 : i32
    return %arg0, %c0_i32 : i32, i32
  }
}

</mosaic_0001>

<llo_original>
// kernel: tpu_custom_call.1
$region0: #{tpu_custom_call.1}
  #allocation0 [shape = 'u32[]', space=smem, size = 0x4, offset = 0x4, fixed_abs, tag = 'smem constant byte address 0x4 - core index']
  #allocation1 [shape = 'u32[72,128]{1,0:T(1,128)}', space=vmem, size = 0x9000, scoped, tag = 'internal scratch']
  %s0 = inlined_call_operand.hbm [shape: f32[8,16,16], index: 0, kind: input, shape index: {}]
  %s1 = inlined_call_operand.hbm [shape: f32[16,96], index: 1, kind: input, shape index: {}]
  %s2 = inlined_call_operand.hbm [shape: f32[32,96], index: 2, kind: input, shape index: {}]
  %s3 = inlined_call_operand.vmem [shape: f32[1,96], index: 3, kind: input, shape index: {}]
  %s4 = inlined_call_operand.vmem [shape: f32[1,32], index: 4, kind: input, shape index: {}]
  %s5 = inlined_call_operand.hbm [shape: f32[16,32], index: 5, kind: output, shape index: {}]
  %s6 = sld [smem:[#allocation0]]
  $region42: #{tpu_custom_call.1} parent=0
    _
  %s8 = ssub.s32 1, %s6
  %s9 = scalar_select 0, %s8, %s6
  $region1: #{tpu_custom_call.1} parent=0
    #allocation2 [shape = 'u8[65536]{0}', space=vmem, size = 0x10000, scoped, tag = 'input window, operand 0, single buffered']
    #allocation3 [shape = 's32[1]{0}', space=sflag, size = 0x4, scoped, tag = 'scoped memory for tpu_custom_call.1']
    #allocation4 [shape = 's32[1]{0}', space=sflag, size = 0x4, scoped, tag = 'scoped memory for tpu_custom_call.1']
    #allocation5 [shape = 'u8[8192]{0}', space=vmem, size = 0x2000, scoped, tag = 'input window, operand 1, single buffered']
    #allocation6 [shape = 's32[1]{0}', space=sflag, size = 0x4, scoped, tag = 'scoped memory for tpu_custom_call.1']
    #allocation7 [shape = 'u8[16384]{0}', space=vmem, size = 0x4000, scoped, tag = 'input window, operand 2, single buffered']
    #allocation8 [shape = 'u8[8192]{0}', space=vmem, size = 0x2000, scoped, tag = 'output window, operand 0, single buffered']
    %10 = vsyncpa [#allocation3], 0
    %11 = vsyncpa [#allocation6], 0
    %12 = vsyncpa [#allocation4], 0
    // Predicated region
    $region2: #{tpu_custom_call.1} parent=1 // pred_check
      _
    $region3: #{tpu_custom_call.1} parent=1 // pred_check_branch
      %14 = sbr.rel (0) target = $region5
    $region4: #{tpu_custom_call.1} parent=1 // pred_region
      %16 = vsyncadd [#allocation3], 0
      %s17 = sshll.u32 %s0, 4
      %s18 = int_to_ptr.hbm [resolvable:$true] %s17
      %s19 = sshll.u32 [#allocation2], 4
      %s20 = int_to_ptr.vmem [resolvable:$true] %s19
      %25 = dma.hbm_to_vmem [thread:$0]  %s18, 2048, %s20, [#allocation3], 128, 128, 8
    $region5: #{tpu_custom_call.1} parent=1 // pred_fallthru
      _
    // Predicated region
    $region6: #{tpu_custom_call.1} parent=1 // pred_check
      _
    $region7: #{tpu_custom_call.1} parent=1 // pred_check_branch
      %27 = sbr.rel (0) target = $region9
    $region8: #{tpu_custom_call.1} parent=1 // pred_region
      %29 = vsyncadd [#allocation6], 0
      %s30 = sshll.u32 %s1, 4
      %s31 = int_to_ptr.hbm [resolvable:$true] %s30
      %s32 = sshll.u32 [#allocation5], 4
      %s33 = int_to_ptr.vmem [resolvable:$true] %s32
      %38 = dma.hbm_to_vmem [thread:$0]  %s31, 256, %s33, [#allocation6], 128, 128, 8
    $region9: #{tpu_custom_call.1} parent=1 // pred_fallthru
      _
    // Predicated region
    $region10: #{tpu_custom_call.1} parent=1 // pred_check
      _
    $region11: #{tpu_custom_call.1} parent=1 // pred_check_branch
      %40 = sbr.rel (0) target = $region13
    $region12: #{tpu_custom_call.1} parent=1 // pred_region
      %42 = vsyncadd [#allocation6], 0
      %s43 = sshll.u32 %s2, 4
      %s44 = int_to_ptr.hbm [resolvable:$true] %s43
      %s45 = sshll.u32 [#allocation7], 4
      %s46 = int_to_ptr.vmem [resolvable:$true] %s45
      %51 = dma.hbm_to_vmem [thread:$0]  %s44, 512, %s46, [#allocation6], 128, 128, 8
    $region13: #{tpu_custom_call.1} parent=1 // pred_fallthru
      _
    // Predicated region
    $region14: #{tpu_custom_call.1} parent=1 // pred_check
      _
    $region15: #{tpu_custom_call.1} parent=1 // pred_check_branch
      %53 = sbr.rel (0) target = $region17
    $region16: #{tpu_custom_call.1} parent=1 // pred_region
      _
    $region17: #{tpu_custom_call.1} parent=1 // pred_fallthru
      _
    // Predicated region
    $region18: #{tpu_custom_call.1} parent=1 // pred_check
      _
    $region19: #{tpu_custom_call.1} parent=1 // pred_check_branch
      %55 = sbr.rel (0) target = $region21
    $region20: #{tpu_custom_call.1} parent=1 // pred_region
      _
    $region21: #{tpu_custom_call.1} parent=1 // pred_fallthru
      _
    // Predicated region
    $region22: #{tpu_custom_call.1} parent=1 // pred_check
      _
    $region23: #{tpu_custom_call.1} parent=1 // pred_check_branch
      %57 = sbr.rel (0) target = $region25
    $region24: #{tpu_custom_call.1} parent=1 // pred_region
      %59 = dma.done [#allocation3], 2048
    $region25: #{tpu_custom_call.1} parent=1 // pred_fallthru
      _
    // Predicated region
    $region26: #{tpu_custom_call.1} parent=1 // pred_check
      _
    $region27: #{tpu_custom_call.1} parent=1 // pred_check_branch
      %61 = sbr.rel (0) target = $region29
    $region28: #{tpu_custom_call.1} parent=1 // pred_region
      %63 = dma.done [#allocation6], 256
    $region29: #{tpu_custom_call.1} parent=1 // pred_fallthru
      _
    // Predicated region
    $region30: #{tpu_custom_call.1} parent=1 // pred_check
      _
    $region31: #{tpu_custom_call.1} parent=1 // pred_check_branch
      %65 = sbr.rel (0) target = $region33
    $region32: #{tpu_custom_call.1} parent=1 // pred_region
      %67 = dma.done [#allocation6], 512
    $region33: #{tpu_custom_call.1} parent=1 // pred_fallthru
      _
    %v68 = vld [vmem:[#allocation7] sm:$0xff]
    %v69 = vld [vmem:[#allocation7 + $0x8] sm:$0xff]
    %v70 = vld [vmem:[#allocation7 + $0x10] sm:$0xff]
    %v71 = vld [vmem:[#allocation7 + $0x18] sm:$0xff]
    %v72 = vld [vmem:[%s3] sm:$0x1]
    %v73 = vld [vmem:[%s4] sm:$0x1]
    %v75 = vperm.slane %v73, 0
    %v76 = vld [vmem:[#allocation2] sm:$0xff]
    %v77 = vld [vmem:[#allocation2 + $0x8] sm:$0xff]
    %v78 = vld [vmem:[#allocation2 + $0x10] sm:$0xff]
    %v79 = vld [vmem:[#allocation2 + $0x18] sm:$0xff]
    %v80 = vld [vmem:[#allocation2 + $0x20] sm:$0xff]
    %v81 = vld [vmem:[#allocation2 + $0x28] sm:$0xff]
    %v82 = vld [vmem:[#allocation2 + $0x30] sm:$0xff]
    %v83 = vld [vmem:[#allocation2 + $0x38] sm:$0xff]
    %v84 = vld [vmem:[#allocation2 + $0x40] sm:$0xff]
    %v85 = vld [vmem:[#allocation2 + $0x48] sm:$0xff]
    %v86 = vld [vmem:[#allocation2 + $0x50] sm:$0xff]
    %v87 = vld [vmem:[#allocation2 + $0x58] sm:$0xff]
    %v88 = vld [vmem:[#allocation2 + $0x60] sm:$0xff]
    %v89 = vld [vmem:[#allocation2 + $0x68] sm:$0xff]
    %v90 = vld [vmem:[#allocation2 + $0x70] sm:$0xff]
    %v91 = vld [vmem:[#allocation2 + $0x78] sm:$0xff]
    %v92 = vld [vmem:[#allocation5] sm:$0xff]
    %v93 = vld [vmem:[#allocation5 + $0x8] sm:$0xff]
    %v95 = vperm.slane %v72, 0
    %vm97 = vcmask 130048
    %v99 = vsel %vm97, %v76, 0
    %v102 = vsel %vm97, %v77, 0
    %v105 = vsel %vm97, %v78, 0
    %v108 = vsel %vm97, %v79, 0
    %v111 = vsel %vm97, %v80, 0
    %v114 = vsel %vm97, %v81, 0
    %v117 = vsel %vm97, %v82, 0
    %v120 = vsel %vm97, %v83, 0
    %v123 = vsel %vm97, %v84, 0
    %v126 = vsel %vm97, %v85, 0
    %v129 = vsel %vm97, %v86, 0
    %v132 = vsel %vm97, %v87, 0
    %v135 = vsel %vm97, %v88, 0
    %v138 = vsel %vm97, %v89, 0
    %v141 = vsel %vm97, %v90, 0
    %v144 = vsel %vm97, %v91, 0
    %146 = vmatpush.msra.mxu0 0.0
    %147 = vmatpush.msra.mxu0 0.0
    %148 = vmatpush.msra.mxu0 0.0
    %149 = vmatpush.msra.mxu0 0.0
    %150 = vmatpush.msra.mxu0 0.0
    %151 = vmatpush.msra.mxu0 0.0
    %152 = vmatpush.msra.mxu0 0.0
    %153 = vmatpush.msra.mxu0 0.0
    %154 = vmatpush.msra.mxu0 0.0
    %155 = vmatpush.msra.mxu0 0.0
    %156 = vmatpush.msra.mxu0 0.0
    %157 = vmatpush.msra.mxu0 0.0
    %158 = vmatpush.msra.mxu0 0.0
    %159 = vmatpush.msra.mxu0 0.0
    %160 = vmatpush.msra.mxu0 %v93
    %161 = vmatpush.msra.mxu0 %v92
    %162 = vmatmul.f32.gmra.mxu0 %v99
    %v163 = vpop.f32.mrf.mxu0
    %v164 = vadd.f32 %v95, %v163
    %165 = vmatmul.f32.gmra.mxu0 %v102
    %v166 = vpop.f32.mrf.mxu0
    %v167 = vadd.f32 %v95, %v166
    %168 = vmatmul.f32.gmra.mxu0 %v105
    %v169 = vpop.f32.mrf.mxu0
    %v170 = vadd.f32 %v95, %v169
    %171 = vmatmul.f32.gmra.mxu0 %v108
    %v172 = vpop.f32.mrf.mxu0
    %v173 = vadd.f32 %v95, %v172
    %174 = vmatmul.f32.gmra.mxu0 %v111
    %v175 = vpop.f32.mrf.mxu0
    %v176 = vadd.f32 %v95, %v175
    %177 = vmatmul.f32.gmra.mxu0 %v114
    %v178 = vpop.f32.mrf.mxu0
    %v179 = vadd.f32 %v95, %v178
    %180 = vmatmul.f32.gmra.mxu0 %v117
    %v181 = vpop.f32.mrf.mxu0
    %v182 = vadd.f32 %v95, %v181
    %183 = vmatmul.f32.gmra.mxu0 %v120
    %v184 = vpop.f32.mrf.mxu0
    %v185 = vadd.f32 %v95, %v184
    %186 = vmatmul.f32.gmra.mxu0 %v123
    %v187 = vpop.f32.mrf.mxu0
    %v188 = vadd.f32 %v95, %v187
    %189 = vmatmul.f32.gmra.mxu0 %v126
    %v190 = vpop.f32.mrf.mxu0
    %v191 = vadd.f32 %v95, %v190
    %192 = vmatmul.f32.gmra.mxu0 %v129
    %v193 = vpop.f32.mrf.mxu0
    %v194 = vadd.f32 %v95, %v193
    %195 = vmatmul.f32.gmra.mxu0 %v132
    %v196 = vpop.f32.mrf.mxu0
    %v197 = vadd.f32 %v95, %v196
    %198 = vmatmul.f32.gmra.mxu0 %v135
    %v199 = vpop.f32.mrf.mxu0
    %v200 = vadd.f32 %v95, %v199
    %201 = vmatmul.f32.gmra.mxu0 %v138
    %v202 = vpop.f32.mrf.mxu0
    %v203 = vadd.f32 %v95, %v202
    %204 = vmatmul.f32.gmra.mxu0 %v141
    %v205 = vpop.f32.mrf.mxu0
    %v206 = vadd.f32 %v95, %v205
    %207 = vmatmul.f32.gmra.mxu0 %v144
    %v208 = vpop.f32.mrf.mxu0
    %v209 = vadd.f32 %v95, %v208
    %210 = vdwg.mxu0
    %vm211 = vcmask 261120
    %v213 = vsel %vm211, 0.0, 0
    %215 = vmatpush.msra.mxu0 0.0
    %216 = vmatpush.msra.mxu0 0.0
    %217 = vmatpush.msra.mxu0 0.0
    %218 = vmatpush.msra.mxu0 0.0
    %219 = vmatpush.msra.mxu0 0.0
    %220 = vmatpush.msra.mxu0 0.0
    %221 = vmatpush.msra.mxu0 0.0
    %222 = vmatpush.msra.mxu0 0.0
    %223 = vmatpush.msra.mxu0 0.0
    %224 = vmatpush.msra.mxu0 0.0
    %225 = vmatpush.msra.mxu0 0.0
    %226 = vmatpush.msra.mxu0 0.0
    %227 = vmatpush.msra.mxu0 %v71
    %228 = vmatpush.msra.mxu0 %v70
    %229 = vmatpush.msra.mxu0 %v69
    %230 = vmatpush.msra.mxu0 %v68
    %231 = vmatmul.f32.gmra.mxu0 %v213
    %v232 = vpop.f32.mrf.mxu0
    %v233 = vadd.f32 0.0, %v232
    %234 = vmatmul.f32.gmra.mxu0 %v213
    %v235 = vpop.f32.mrf.mxu0
    %v236 = vadd.f32 0.0, %v235
    %237 = vdwg.mxu0
    %v238 = vadd.f32 %v164, %v233
    %v239 = vadd.f32 %v167, %v236
    %v240 = vxor.u32 %v238, 2147483648
    %v241 = vxor.u32 %v239, 2147483648
    %v242 = vmul.f32 %v240, 1.442695
    %v243 = vpow.pop %v242
    %v244 = vmul.f32 %v241, 1.442695
    %v245 = vpow.pop %v244
    %v246 = vadd.f32 %v243, 1.0
    %v247 = vadd.f32 %v245, 1.0
    %v248 = vrcp.pop %v246
    %v249 = vmul.f32 %v246, %v248
    %v250 = vsub.f32 1.0, %v249
    %v251 = vmul.f32 %v248, %v250
    %v252 = vadd.f32 %v248, %v251
    %vm253 = vweird.f32 %v246
    %vm254 = vweird.f32 %v248
    %vm255 = vmor %vm253, %vm254
    %v256 = vsel %vm255, %v248, %v252
    %v257 = vand.u32 2147483647, %v246
    %vm258 = vcmp.eq.f32.partialorder %v257, 8.507059e+37
    %v259 = vand.u32 %v246, 2147483648
    %v260 = vor.u32 1.1754944e-38, %v259
    %v261 = vsel %vm258, %v260, %v256
    %v262 = vmul.f32 1.0, %v261
    %v263 = vrcp.pop %v247
    %v264 = vmul.f32 %v247, %v263
    %v265 = vsub.f32 1.0, %v264
    %v266 = vmul.f32 %v263, %v265
    %v267 = vadd.f32 %v263, %v266
    %vm268 = vweird.f32 %v247
    %vm269 = vweird.f32 %v263
    %vm270 = vmor %vm268, %vm269
    %v271 = vsel %vm270, %v263, %v267
    %v272 = vand.u32 2147483647, %v247
    %vm273 = vcmp.eq.f32.partialorder %v272, 8.507059e+37
    %v274 = vand.u32 %v247, 2147483648
    %v275 = vor.u32 1.1754944e-38, %v274
    %v276 = vsel %vm273, %v275, %v271
    %v277 = vmul.f32 1.0, %v276
    %278 = vrot.lane.b32.xlu0 %v75, 64
    %v279 = vpop.permute.xlu0 %278
    %v281 = vadd.f32 %v233, %v279
    %v282 = vadd.f32 %v236, %v279
    %285 = vrot.lane.b32.xlu0 %v281, 64
    %v286 = vpop.permute.xlu0 %285
    %287 = vrot.lane.b32.xlu0 %v282, 64
    %v288 = vpop.permute.xlu0 %287
    %v291 = vmul.f32 %v262, %v286
    %v292 = vmul.f32 %v277, %v288
    %295 = vrot.lane.b32.xlu0 %v291, 64
    %v296 = vpop.permute.xlu0 %295
    %297 = vrot.lane.b32.xlu0 %v292, 64
    %v298 = vpop.permute.xlu0 %297
    %v301 = vadd.f32 %v164, %v296
    %v302 = vadd.f32 %v167, %v298
    %v303 = vtanh.pop %v301
    %v304 = vtanh.pop %v302
    %v305 = vsub.f32 1.0, %v262
    %v306 = vsub.f32 1.0, %v277
    %309 = vrot.lane.b32.xlu0 %v303, 96
    %v310 = vpop.permute.xlu0 %309
    %311 = vrot.lane.b32.xlu0 %v304, 96
    %v312 = vpop.permute.xlu0 %311
    %v315 = vmul.f32 %v305, %v310
    %v316 = vmul.f32 %v306, %v312
    %v317 = vmul.f32 %v262, 0.0
    %v318 = vmul.f32 %v277, 0.0
    %v319 = vadd.f32 %v315, %v317
    %v320 = vadd.f32 %v316, %v318
    %v321 = vadd.f32 %v319, 0.0
    %v322 = vadd.f32 %v320, 0.0
    %325 = vrot.lane.b32.xlu0 %v319, 96
    %v326 = vpop.permute.xlu0 %325
    %327 = vrot.lane.b32.xlu0 %v320, 96
    %v328 = vpop.permute.xlu0 %327
    %v329 = vsel %vm211, %v326, 0
    %v331 = vsel %vm211, %v328, 0
    %333 = vmatpush.msra.mxu0 0.0
    %334 = vmatpush.msra.mxu0 0.0
    %335 = vmatpush.msra.mxu0 0.0
    %336 = vmatpush.msra.mxu0 0.0
    %337 = vmatpush.msra.mxu0 0.0
    %338 = vmatpush.msra.mxu0 0.0
    %339 = vmatpush.msra.mxu0 0.0
    %340 = vmatpush.msra.mxu0 0.0
    %341 = vmatpush.msra.mxu0 0.0
    %342 = vmatpush.msra.mxu0 0.0
    %343 = vmatpush.msra.mxu0 0.0
    %344 = vmatpush.msra.mxu0 0.0
    %345 = vmatpush.msra.mxu0 %v71
    %346 = vmatpush.msra.mxu0 %v70
    %347 = vmatpush.msra.mxu0 %v69
    %348 = vmatpush.msra.mxu0 %v68
    %349 = vmatmul.f32.gmra.mxu0 %v329
    %v350 = vpop.f32.mrf.mxu0
    %v351 = vadd.f32 0.0, %v350
    %352 = vmatmul.f32.gmra.mxu0 %v331
    %v353 = vpop.f32.mrf.mxu0
    %v354 = vadd.f32 0.0, %v353
    %355 = vdwg.mxu0
    %v356 = vadd.f32 %v170, %v351
    %v357 = vadd.f32 %v173, %v354
    %v358 = vxor.u32 %v356, 2147483648
    %v359 = vxor.u32 %v357, 2147483648
    %v360 = vmul.f32 %v358, 1.442695
    %v361 = vpow.pop %v360
    %v362 = vmul.f32 %v359, 1.442695
    %v363 = vpow.pop %v362
    %v364 = vadd.f32 %v361, 1.0
    %v365 = vadd.f32 %v363, 1.0
    %v366 = vrcp.pop %v364
    %v367 = vmul.f32 %v364, %v366
    %v368 = vsub.f32 1.0, %v367
    %v369 = vmul.f32 %v366, %v368
    %v370 = vadd.f32 %v366, %v369
    %vm371 = vweird.f32 %v364
    %vm372 = vweird.f32 %v366
    %vm373 = vmor %vm371, %vm372
    %v374 = vsel %vm373, %v366, %v370
    %v375 = vand.u32 2147483647, %v364
    %vm376 = vcmp.eq.f32.partialorder %v375, 8.507059e+37
    %v377 = vand.u32 %v364, 2147483648
    %v378 = vor.u32 1.1754944e-38, %v377
    %v379 = vsel %vm376, %v378, %v374
    %v380 = vmul.f32 1.0, %v379
    %v381 = vrcp.pop %v365
    %v382 = vmul.f32 %v365, %v381
    %v383 = vsub.f32 1.0, %v382
    %v384 = vmul.f32 %v381, %v383
    %v385 = vadd.f32 %v381, %v384
    %vm386 = vweird.f32 %v365
    %vm387 = vweird.f32 %v381
    %vm388 = vmor %vm386, %vm387
    %v389 = vsel %vm388, %v381, %v385
    %v390 = vand.u32 2147483647, %v365
    %vm391 = vcmp.eq.f32.partialorder %v390, 8.507059e+37
    %v392 = vand.u32 %v365, 2147483648
    %v393 = vor.u32 1.1754944e-38, %v392
    %v394 = vsel %vm391, %v393, %v389
    %v395 = vmul.f32 1.0, %v394
    %v396 = vadd.f32 %v351, %v279
    %v397 = vadd.f32 %v354, %v279
    %400 = vrot.lane.b32.xlu0 %v396, 64
    %v401 = vpop.permute.xlu0 %400
    %402 = vrot.lane.b32.xlu0 %v397, 64
    %v403 = vpop.permute.xlu0 %402
    %v406 = vmul.f32 %v380, %v401
    %v407 = vmul.f32 %v395, %v403
    %410 = vrot.lane.b32.xlu0 %v406, 64
    %v411 = vpop.permute.xlu0 %410
    %412 = vrot.lane.b32.xlu0 %v407, 64
    %v413 = vpop.permute.xlu0 %412
    %v416 = vadd.f32 %v170, %v411
    %v417 = vadd.f32 %v173, %v413
    %v418 = vtanh.pop %v416
    %v419 = vtanh.pop %v417
    %v420 = vsub.f32 1.0, %v380
    %v421 = vsub.f32 1.0, %v395
    %424 = vrot.lane.b32.xlu0 %v418, 96
    %v425 = vpop.permute.xlu0 %424
    %426 = vrot.lane.b32.xlu0 %v419, 96
    %v427 = vpop.permute.xlu0 %426
    %v430 = vmul.f32 %v420, %v425
    %v431 = vmul.f32 %v421, %v427
    %v432 = vmul.f32 %v380, %v319
    %v433 = vmul.f32 %v395, %v320
    %v434 = vadd.f32 %v430, %v432
    %v435 = vadd.f32 %v431, %v433
    %v436 = vadd.f32 %v321, %v434
    %v437 = vadd.f32 %v322, %v435
    %440 = vrot.lane.b32.xlu0 %v434, 96
    %v441 = vpop.permute.xlu0 %440
    %442 = vrot.lane.b32.xlu0 %v435, 96
    %v443 = vpop.permute.xlu0 %442
    %v444 = vsel %vm211, %v441, 0
    %v446 = vsel %vm211, %v443, 0
    %448 = vmatpush.msra.mxu0 0.0
    %449 = vmatpush.msra.mxu0 0.0
    %450 = vmatpush.msra.mxu0 0.0
    %451 = vmatpush.msra.mxu0 0.0
    %452 = vmatpush.msra.mxu0 0.0
    %453 = vmatpush.msra.mxu0 0.0
    %454 = vmatpush.msra.mxu0 0.0
    %455 = vmatpush.msra.mxu0 0.0
    %456 = vmatpush.msra.mxu0 0.0
    %457 = vmatpush.msra.mxu0 0.0
    %458 = vmatpush.msra.mxu0 0.0
    %459 = vmatpush.msra.mxu0 0.0
    %460 = vmatpush.msra.mxu0 %v71
    %461 = vmatpush.msra.mxu0 %v70
    %462 = vmatpush.msra.mxu0 %v69
    %463 = vmatpush.msra.mxu0 %v68
    %464 = vmatmul.f32.gmra.mxu0 %v444
    %v465 = vpop.f32.mrf.mxu0
    %v466 = vadd.f32 0.0, %v465
    %467 = vmatmul.f32.gmra.mxu0 %v446
    %v468 = vpop.f32.mrf.mxu0
    %v469 = vadd.f32 0.0, %v468
    %470 = vdwg.mxu0
    %v471 = vadd.f32 %v176, %v466
    %v472 = vadd.f32 %v179, %v469
    %v473 = vxor.u32 %v471, 2147483648
    %v474 = vxor.u32 %v472, 2147483648
    %v475 = vmul.f32 %v473, 1.442695
    %v476 = vpow.pop %v475
    %v477 = vmul.f32 %v474, 1.442695
    %v478 = vpow.pop %v477
    %v479 = vadd.f32 %v476, 1.0
    %v480 = vadd.f32 %v478, 1.0
    %v481 = vrcp.pop %v479
    %v482 = vmul.f32 %v479, %v481
    %v483 = vsub.f32 1.0, %v482
    %v484 = vmul.f32 %v481, %v483
    %v485 = vadd.f32 %v481, %v484
    %vm486 = vweird.f32 %v479
    %vm487 = vweird.f32 %v481
    %vm488 = vmor %vm486, %vm487
    %v489 = vsel %vm488, %v481, %v485
    %v490 = vand.u32 2147483647, %v479
    %vm491 = vcmp.eq.f32.partialorder %v490, 8.507059e+37
    %v492 = vand.u32 %v479, 2147483648
    %v493 = vor.u32 1.1754944e-38, %v492
    %v494 = vsel %vm491, %v493, %v489
    %v495 = vmul.f32 1.0, %v494
    %v496 = vrcp.pop %v480
    %v497 = vmul.f32 %v480, %v496
    %v498 = vsub.f32 1.0, %v497
    %v499 = vmul.f32 %v496, %v498
    %v500 = vadd.f32 %v496, %v499
    %vm501 = vweird.f32 %v480
    %vm502 = vweird.f32 %v496
    %vm503 = vmor %vm501, %vm502
    %v504 = vsel %vm503, %v496, %v500
    %v505 = vand.u32 2147483647, %v480
    %vm506 = vcmp.eq.f32.partialorder %v505, 8.507059e+37
    %v507 = vand.u32 %v480, 2147483648
    %v508 = vor.u32 1.1754944e-38, %v507
    %v509 = vsel %vm506, %v508, %v504
    %v510 = vmul.f32 1.0, %v509
    %v511 = vadd.f32 %v466, %v279
    %v512 = vadd.f32 %v469, %v279
    %515 = vrot.lane.b32.xlu0 %v511, 64
    %v516 = vpop.permute.xlu0 %515
    %517 = vrot.lane.b32.xlu0 %v512, 64
    %v518 = vpop.permute.xlu0 %517
    %v521 = vmul.f32 %v495, %v516
    %v522 = vmul.f32 %v510, %v518
    %525 = vrot.lane.b32.xlu0 %v521, 64
    %v526 = vpop.permute.xlu0 %525
    %527 = vrot.lane.b32.xlu0 %v522, 64
    %v528 = vpop.permute.xlu0 %527
    %v531 = vadd.f32 %v176, %v526
    %v532 = vadd.f32 %v179, %v528
    %v533 = vtanh.pop %v531
    %v534 = vtanh.pop %v532
    %v535 = vsub.f32 1.0, %v495
    %v536 = vsub.f32 1.0, %v510
    %539 = vrot.lane.b32.xlu0 %v533, 96
    %v540 = vpop.permute.xlu0 %539
    %541 = vrot.lane.b32.xlu0 %v534, 96
    %v542 = vpop.permute.xlu0 %541
    %v545 = vmul.f32 %v535, %v540
    %v546 = vmul.f32 %v536, %v542
    %v547 = vmul.f32 %v495, %v434
    %v548 = vmul.f32 %v510, %v435
    %v549 = vadd.f32 %v545, %v547
    %v550 = vadd.f32 %v546, %v548
    %v551 = vadd.f32 %v436, %v549
    %v552 = vadd.f32 %v437, %v550
    %555 = vrot.lane.b32.xlu0 %v549, 96
    %v556 = vpop.permute.xlu0 %555
    %557 = vrot.lane.b32.xlu0 %v550, 96
    %v558 = vpop.permute.xlu0 %557
    %v559 = vsel %vm211, %v556, 0
    %v561 = vsel %vm211, %v558, 0
    %563 = vmatpush.msra.mxu0 0.0
    %564 = vmatpush.msra.mxu0 0.0
    %565 = vmatpush.msra.mxu0 0.0
    %566 = vmatpush.msra.mxu0 0.0
    %567 = vmatpush.msra.mxu0 0.0
    %568 = vmatpush.msra.mxu0 0.0
    %569 = vmatpush.msra.mxu0 0.0
    %570 = vmatpush.msra.mxu0 0.0
    %571 = vmatpush.msra.mxu0 0.0
    %572 = vmatpush.msra.mxu0 0.0
    %573 = vmatpush.msra.mxu0 0.0
    %574 = vmatpush.msra.mxu0 0.0
    %575 = vmatpush.msra.mxu0 %v71
    %576 = vmatpush.msra.mxu0 %v70
    %577 = vmatpush.msra.mxu0 %v69
    %578 = vmatpush.msra.mxu0 %v68
    %579 = vmatmul.f32.gmra.mxu0 %v559
    %v580 = vpop.f32.mrf.mxu0
    %v581 = vadd.f32 0.0, %v580
    %582 = vmatmul.f32.gmra.mxu0 %v561
    %v583 = vpop.f32.mrf.mxu0
    %v584 = vadd.f32 0.0, %v583
    %585 = vdwg.mxu0
    %v586 = vadd.f32 %v182, %v581
    %v587 = vadd.f32 %v185, %v584
    %v588 = vxor.u32 %v586, 2147483648
    %v589 = vxor.u32 %v587, 2147483648
    %v590 = vmul.f32 %v588, 1.442695
    %v591 = vpow.pop %v590
    %v592 = vmul.f32 %v589, 1.442695
    %v593 = vpow.pop %v592
    %v594 = vadd.f32 %v591, 1.0
    %v595 = vadd.f32 %v593, 1.0
    %v596 = vrcp.pop %v594
    %v597 = vmul.f32 %v594, %v596
    %v598 = vsub.f32 1.0, %v597
    %v599 = vmul.f32 %v596, %v598
    %v600 = vadd.f32 %v596, %v599
    %vm601 = vweird.f32 %v594
    %vm602 = vweird.f32 %v596
    %vm603 = vmor %vm601, %vm602
    %v604 = vsel %vm603, %v596, %v600
    %v605 = vand.u32 2147483647, %v594
    %vm606 = vcmp.eq.f32.partialorder %v605, 8.507059e+37
    %v607 = vand.u32 %v594, 2147483648
    %v608 = vor.u32 1.1754944e-38, %v607
    %v609 = vsel %vm606, %v608, %v604
    %v610 = vmul.f32 1.0, %v609
    %v611 = vrcp.pop %v595
    %v612 = vmul.f32 %v595, %v611
    %v613 = vsub.f32 1.0, %v612
    %v614 = vmul.f32 %v611, %v613
    %v615 = vadd.f32 %v611, %v614
    %vm616 = vweird.f32 %v595
    %vm617 = vweird.f32 %v611
    %vm618 = vmor %vm616, %vm617
    %v619 = vsel %vm618, %v611, %v615
    %v620 = vand.u32 2147483647, %v595
    %vm621 = vcmp.eq.f32.partialorder %v620, 8.507059e+37
    %v622 = vand.u32 %v595, 2147483648
    %v623 = vor.u32 1.1754944e-38, %v622
    %v624 = vsel %vm621, %v623, %v619
    %v625 = vmul.f32 1.0, %v624
    %v626 = vadd.f32 %v581, %v279
    %v627 = vadd.f32 %v584, %v279
    %630 = vrot.lane.b32.xlu0 %v626, 64
    %v631 = vpop.permute.xlu0 %630
    %632 = vrot.lane.b32.xlu0 %v627, 64
    %v633 = vpop.permute.xlu0 %632
    %v636 = vmul.f32 %v610, %v631
    %v637 = vmul.f32 %v625, %v633
    %640 = vrot.lane.b32.xlu0 %v636, 64
    %v641 = vpop.permute.xlu0 %640
    %642 = vrot.lane.b32.xlu0 %v637, 64
    %v643 = vpop.permute.xlu0 %642
    %v646 = vadd.f32 %v182, %v641
    %v647 = vadd.f32 %v185, %v643
    %v648 = vtanh.pop %v646
    %v649 = vtanh.pop %v647
    %v650 = vsub.f32 1.0, %v610
    %v651 = vsub.f32 1.0, %v625
    %654 = vrot.lane.b32.xlu0 %v648, 96
    %v655 = vpop.permute.xlu0 %654
    %656 = vrot.lane.b32.xlu0 %v649, 96
    %v657 = vpop.permute.xlu0 %656
    %v660 = vmul.f32 %v650, %v655
    %v661 = vmul.f32 %v651, %v657
    %v662 = vmul.f32 %v610, %v549
    %v663 = vmul.f32 %v625, %v550
    %v664 = vadd.f32 %v660, %v662
    %v665 = vadd.f32 %v661, %v663
    %v666 = vadd.f32 %v551, %v664
    %v667 = vadd.f32 %v552, %v665
    %670 = vrot.lane.b32.xlu0 %v664, 96
    %v671 = vpop.permute.xlu0 %670
    %672 = vrot.lane.b32.xlu0 %v665, 96
    %v673 = vpop.permute.xlu0 %672
    %v674 = vsel %vm211, %v671, 0
    %v676 = vsel %vm211, %v673, 0
    %678 = vmatpush.msra.mxu0 0.0
    %679 = vmatpush.msra.mxu0 0.0
    %680 = vmatpush.msra.mxu0 0.0
    %681 = vmatpush.msra.mxu0 0.0
    %682 = vmatpush.msra.mxu0 0.0
    %683 = vmatpush.msra.mxu0 0.0
    %684 = vmatpush.msra.mxu0 0.0
    %685 = vmatpush.msra.mxu0 0.0
    %686 = vmatpush.msra.mxu0 0.0
    %687 = vmatpush.msra.mxu0 0.0
    %688 = vmatpush.msra.mxu0 0.0
    %689 = vmatpush.msra.mxu0 0.0
    %690 = vmatpush.msra.mxu0 %v71
    %691 = vmatpush.msra.mxu0 %v70
    %692 = vmatpush.msra.mxu0 %v69
    %693 = vmatpush.msra.mxu0 %v68
    %694 = vmatmul.f32.gmra.mxu0 %v674
    %v695 = vpop.f32.mrf.mxu0
    %v696 = vadd.f32 0.0, %v695
    %697 = vmatmul.f32.gmra.mxu0 %v676
    %v698 = vpop.f32.mrf.mxu0
    %v699 = vadd.f32 0.0, %v698
    %700 = vdwg.mxu0
    %v701 = vadd.f32 %v188, %v696
    %v702 = vadd.f32 %v191, %v699
    %v703 = vxor.u32 %v701, 2147483648
    %v704 = vxor.u32 %v702, 2147483648
    %v705 = vmul.f32 %v703, 1.442695
    %v706 = vpow.pop %v705
    %v707 = vmul.f32 %v704, 1.442695
    %v708 = vpow.pop %v707
    %v709 = vadd.f32 %v706, 1.0
    %v710 = vadd.f32 %v708, 1.0
    %v711 = vrcp.pop %v709
    %v712 = vmul.f32 %v709, %v711
    %v713 = vsub.f32 1.0, %v712
    %v714 = vmul.f32 %v711, %v713
    %v715 = vadd.f32 %v711, %v714
    %vm716 = vweird.f32 %v709
    %vm717 = vweird.f32 %v711
    %vm718 = vmor %vm716, %vm717
    %v719 = vsel %vm718, %v711, %v715
    %v720 = vand.u32 2147483647, %v709
    %vm721 = vcmp.eq.f32.partialorder %v720, 8.507059e+37
    %v722 = vand.u32 %v709, 2147483648
    %v723 = vor.u32 1.1754944e-38, %v722
    %v724 = vsel %vm721, %v723, %v719
    %v725 = vmul.f32 1.0, %v724
    %v726 = vrcp.pop %v710
    %v727 = vmul.f32 %v710, %v726
    %v728 = vsub.f32 1.0, %v727
    %v729 = vmul.f32 %v726, %v728
    %v730 = vadd.f32 %v726, %v729
    %vm731 = vweird.f32 %v710
    %vm732 = vweird.f32 %v726
    %vm733 = vmor %vm731, %vm732
    %v734 = vsel %vm733, %v726, %v730
    %v735 = vand.u32 2147483647, %v710
    %vm736 = vcmp.eq.f32.partialorder %v735, 8.507059e+37
    %v737 = vand.u32 %v710, 2147483648
    %v738 = vor.u32 1.1754944e-38, %v737
    %v739 = vsel %vm736, %v738, %v734
    %v740 = vmul.f32 1.0, %v739
    %v741 = vadd.f32 %v696, %v279
    %v742 = vadd.f32 %v699, %v279
    %745 = vrot.lane.b32.xlu0 %v741, 64
    %v746 = vpop.permute.xlu0 %745
    %747 = vrot.lane.b32.xlu0 %v742, 64
    %v748 = vpop.permute.xlu0 %747
    %v751 = vmul.f32 %v725, %v746
    %v752 = vmul.f32 %v740, %v748
    %755 = vrot.lane.b32.xlu0 %v751, 64
    %v756 = vpop.permute.xlu0 %755
    %757 = vrot.lane.b32.xlu0 %v752, 64
    %v758 = vpop.permute.xlu0 %757
    %v761 = vadd.f32 %v188, %v756
    %v762 = vadd.f32 %v191, %v758
    %v763 = vtanh.pop %v761
    %v764 = vtanh.pop %v762
    %v765 = vsub.f32 1.0, %v725
    %v766 = vsub.f32 1.0, %v740
    %769 = vrot.lane.b32.xlu0 %v763, 96
    %v770 = vpop.permute.xlu0 %769
    %771 = vrot.lane.b32.xlu0 %v764, 96
    %v772 = vpop.permute.xlu0 %771
    %v775 = vmul.f32 %v765, %v770
    %v776 = vmul.f32 %v766, %v772
    %v777 = vmul.f32 %v725, %v664
    %v778 = vmul.f32 %v740, %v665
    %v779 = vadd.f32 %v775, %v777
    %v780 = vadd.f32 %v776, %v778
    %v781 = vadd.f32 %v666, %v779
    %v782 = vadd.f32 %v667, %v780
    %785 = vrot.lane.b32.xlu0 %v779, 96
    %v786 = vpop.permute.xlu0 %785
    %787 = vrot.lane.b32.xlu0 %v780, 96
    %v788 = vpop.permute.xlu0 %787
    %v789 = vsel %vm211, %v786, 0
    %v791 = vsel %vm211, %v788, 0
    %793 = vmatpush.msra.mxu0 0.0
    %794 = vmatpush.msra.mxu0 0.0
    %795 = vmatpush.msra.mxu0 0.0
    %796 = vmatpush.msra.mxu0 0.0
    %797 = vmatpush.msra.mxu0 0.0
    %798 = vmatpush.msra.mxu0 0.0
    %799 = vmatpush.msra.mxu0 0.0
    %800 = vmatpush.msra.mxu0 0.0
    %801 = vmatpush.msra.mxu0 0.0
    %802 = vmatpush.msra.mxu0 0.0
    %803 = vmatpush.msra.mxu0 0.0
    %804 = vmatpush.msra.mxu0 0.0
    %805 = vmatpush.msra.mxu0 %v71
    %806 = vmatpush.msra.mxu0 %v70
    %807 = vmatpush.msra.mxu0 %v69
    %808 = vmatpush.msra.mxu0 %v68
    %809 = vmatmul.f32.gmra.mxu0 %v789
    %v810 = vpop.f32.mrf.mxu0
    %v811 = vadd.f32 0.0, %v810
    %812 = vmatmul.f32.gmra.mxu0 %v791
    %v813 = vpop.f32.mrf.mxu0
    %v814 = vadd.f32 0.0, %v813
    %815 = vdwg.mxu0
    %v816 = vadd.f32 %v194, %v811
    %v817 = vadd.f32 %v197, %v814
    %v818 = vxor.u32 %v816, 2147483648
    %v819 = vxor.u32 %v817, 2147483648
    %v820 = vmul.f32 %v818, 1.442695
    %v821 = vpow.pop %v820
    %v822 = vmul.f32 %v819, 1.442695
    %v823 = vpow.pop %v822
    %v824 = vadd.f32 %v821, 1.0
    %v825 = vadd.f32 %v823, 1.0
    %v826 = vrcp.pop %v824
    %v827 = vmul.f32 %v824, %v826
    %v828 = vsub.f32 1.0, %v827
    %v829 = vmul.f32 %v826, %v828
    %v830 = vadd.f32 %v826, %v829
    %vm831 = vweird.f32 %v824
    %vm832 = vweird.f32 %v826
    %vm833 = vmor %vm831, %vm832
    %v834 = vsel %vm833, %v826, %v830
    %v835 = vand.u32 2147483647, %v824
    %vm836 = vcmp.eq.f32.partialorder %v835, 8.507059e+37
    %v837 = vand.u32 %v824, 2147483648
    %v838 = vor.u32 1.1754944e-38, %v837
    %v839 = vsel %vm836, %v838, %v834
    %v840 = vmul.f32 1.0, %v839
    %v841 = vrcp.pop %v825
    %v842 = vmul.f32 %v825, %v841
    %v843 = vsub.f32 1.0, %v842
    %v844 = vmul.f32 %v841, %v843
    %v845 = vadd.f32 %v841, %v844
    %vm846 = vweird.f32 %v825
    %vm847 = vweird.f32 %v841
    %vm848 = vmor %vm846, %vm847
    %v849 = vsel %vm848, %v841, %v845
    %v850 = vand.u32 2147483647, %v825
    %vm851 = vcmp.eq.f32.partialorder %v850, 8.507059e+37
    %v852 = vand.u32 %v825, 2147483648
    %v853 = vor.u32 1.1754944e-38, %v852
    %v854 = vsel %vm851, %v853, %v849
    %v855 = vmul.f32 1.0, %v854
    %v856 = vadd.f32 %v811, %v279
    %v857 = vadd.f32 %v814, %v279
    %860 = vrot.lane.b32.xlu0 %v856, 64
    %v861 = vpop.permute.xlu0 %860
    %862 = vrot.lane.b32.xlu0 %v857, 64
    %v863 = vpop.permute.xlu0 %862
    %v866 = vmul.f32 %v840, %v861
    %v867 = vmul.f32 %v855, %v863
    %870 = vrot.lane.b32.xlu0 %v866, 64
    %v871 = vpop.permute.xlu0 %870
    %872 = vrot.lane.b32.xlu0 %v867, 64
    %v873 = vpop.permute.xlu0 %872
    %v876 = vadd.f32 %v194, %v871
    %v877 = vadd.f32 %v197, %v873
    %v878 = vtanh.pop %v876
    %v879 = vtanh.pop %v877
    %v880 = vsub.f32 1.0, %v840
    %v881 = vsub.f32 1.0, %v855
    %884 = vrot.lane.b32.xlu0 %v878, 96
    %v885 = vpop.permute.xlu0 %884
    %886 = vrot.lane.b32.xlu0 %v879, 96
    %v887 = vpop.permute.xlu0 %886
    %v890 = vmul.f32 %v880, %v885
    %v891 = vmul.f32 %v881, %v887
    %v892 = vmul.f32 %v840, %v779
    %v893 = vmul.f32 %v855, %v780
    %v894 = vadd.f32 %v890, %v892
    %v895 = vadd.f32 %v891, %v893
    %v896 = vadd.f32 %v781, %v894
    %v897 = vadd.f32 %v782, %v895
    %900 = vrot.lane.b32.xlu0 %v894, 96
    %v901 = vpop.permute.xlu0 %900
    %902 = vrot.lane.b32.xlu0 %v895, 96
    %v903 = vpop.permute.xlu0 %902
    %v904 = vsel %vm211, %v901, 0
    %v906 = vsel %vm211, %v903, 0
    %908 = vmatpush.msra.mxu0 0.0
    %909 = vmatpush.msra.mxu0 0.0
    %910 = vmatpush.msra.mxu0 0.0
    %911 = vmatpush.msra.mxu0 0.0
    %912 = vmatpush.msra.mxu0 0.0
    %913 = vmatpush.msra.mxu0 0.0
    %914 = vmatpush.msra.mxu0 0.0
    %915 = vmatpush.msra.mxu0 0.0
    %916 = vmatpush.msra.mxu0 0.0
    %917 = vmatpush.msra.mxu0 0.0
    %918 = vmatpush.msra.mxu0 0.0
    %919 = vmatpush.msra.mxu0 0.0
    %920 = vmatpush.msra.mxu0 %v71
    %921 = vmatpush.msra.mxu0 %v70
    %922 = vmatpush.msra.mxu0 %v69
    %923 = vmatpush.msra.mxu0 %v68
    %924 = vmatmul.f32.gmra.mxu0 %v904
    %v925 = vpop.f32.mrf.mxu0
    %v926 = vadd.f32 0.0, %v925
    %927 = vmatmul.f32.gmra.mxu0 %v906
    %v928 = vpop.f32.mrf.mxu0
    %v929 = vadd.f32 0.0, %v928
    %930 = vdwg.mxu0
    %v931 = vadd.f32 %v200, %v926
    %v932 = vadd.f32 %v203, %v929
    %v933 = vxor.u32 %v931, 2147483648
    %v934 = vxor.u32 %v932, 2147483648
    %v935 = vmul.f32 %v933, 1.442695
    %v936 = vpow.pop %v935
    %v937 = vmul.f32 %v934, 1.442695
    %v938 = vpow.pop %v937
    %v939 = vadd.f32 %v936, 1.0
    %v940 = vadd.f32 %v938, 1.0
    %v941 = vrcp.pop %v939
    %v942 = vmul.f32 %v939, %v941
    %v943 = vsub.f32 1.0, %v942
    %v944 = vmul.f32 %v941, %v943
    %v945 = vadd.f32 %v941, %v944
    %vm946 = vweird.f32 %v939
    %vm947 = vweird.f32 %v941
    %vm948 = vmor %vm946, %vm947
    %v949 = vsel %vm948, %v941, %v945
    %v950 = vand.u32 2147483647, %v939
    %vm951 = vcmp.eq.f32.partialorder %v950, 8.507059e+37
    %v952 = vand.u32 %v939, 2147483648
    %v953 = vor.u32 1.1754944e-38, %v952
    %v954 = vsel %vm951, %v953, %v949
    %v955 = vmul.f32 1.0, %v954
    %v956 = vrcp.pop %v940
    %v957 = vmul.f32 %v940, %v956
    %v958 = vsub.f32 1.0, %v957
    %v959 = vmul.f32 %v956, %v958
    %v960 = vadd.f32 %v956, %v959
    %vm961 = vweird.f32 %v940
    %vm962 = vweird.f32 %v956
    %vm963 = vmor %vm961, %vm962
    %v964 = vsel %vm963, %v956, %v960
    %v965 = vand.u32 2147483647, %v940
    %vm966 = vcmp.eq.f32.partialorder %v965, 8.507059e+37
    %v967 = vand.u32 %v940, 2147483648
    %v968 = vor.u32 1.1754944e-38, %v967
    %v969 = vsel %vm966, %v968, %v964
    %v970 = vmul.f32 1.0, %v969
    %v971 = vadd.f32 %v926, %v279
    %v972 = vadd.f32 %v929, %v279
    %975 = vrot.lane.b32.xlu0 %v971, 64
    %v976 = vpop.permute.xlu0 %975
    %977 = vrot.lane.b32.xlu0 %v972, 64
    %v978 = vpop.permute.xlu0 %977
    %v981 = vmul.f32 %v955, %v976
    %v982 = vmul.f32 %v970, %v978
    %985 = vrot.lane.b32.xlu0 %v981, 64
    %v986 = vpop.permute.xlu0 %985
    %987 = vrot.lane.b32.xlu0 %v982, 64
    %v988 = vpop.permute.xlu0 %987
    %v991 = vadd.f32 %v200, %v986
    %v992 = vadd.f32 %v203, %v988
    %v993 = vtanh.pop %v991
    %v994 = vtanh.pop %v992
    %v995 = vsub.f32 1.0, %v955
    %v996 = vsub.f32 1.0, %v970
    %999 = vrot.lane.b32.xlu0 %v993, 96
    %v1000 = vpop.permute.xlu0 %999
    %1001 = vrot.lane.b32.xlu0 %v994, 96
    %v1002 = vpop.permute.xlu0 %1001
    %v1005 = vmul.f32 %v995, %v1000
    %v1006 = vmul.f32 %v996, %v1002
    %v1007 = vmul.f32 %v955, %v894
    %v1008 = vmul.f32 %v970, %v895
    %v1009 = vadd.f32 %v1005, %v1007
    %v1010 = vadd.f32 %v1006, %v1008
    %v1011 = vadd.f32 %v896, %v1009
    %v1012 = vadd.f32 %v897, %v1010
    %1015 = vrot.lane.b32.xlu0 %v1009, 96
    %v1016 = vpop.permute.xlu0 %1015
    %1017 = vrot.lane.b32.xlu0 %v1010, 96
    %v1018 = vpop.permute.xlu0 %1017
    %v1019 = vsel %vm211, %v1016, 0
    %v1021 = vsel %vm211, %v1018, 0
    %1023 = vmatpush.msra.mxu0 0.0
    %1024 = vmatpush.msra.mxu0 0.0
    %1025 = vmatpush.msra.mxu0 0.0
    %1026 = vmatpush.msra.mxu0 0.0
    %1027 = vmatpush.msra.mxu0 0.0
    %1028 = vmatpush.msra.mxu0 0.0
    %1029 = vmatpush.msra.mxu0 0.0
    %1030 = vmatpush.msra.mxu0 0.0
    %1031 = vmatpush.msra.mxu0 0.0
    %1032 = vmatpush.msra.mxu0 0.0
    %1033 = vmatpush.msra.mxu0 0.0
    %1034 = vmatpush.msra.mxu0 0.0
    %1035 = vmatpush.msra.mxu0 %v71
    %1036 = vmatpush.msra.mxu0 %v70
    %1037 = vmatpush.msra.mxu0 %v69
    %1038 = vmatpush.msra.mxu0 %v68
    %1039 = vmatmul.f32.gmra.mxu0 %v1019
    %v1040 = vpop.f32.mrf.mxu0
    %v1041 = vadd.f32 0.0, %v1040
    %1042 = vmatmul.f32.gmra.mxu0 %v1021
    %v1043 = vpop.f32.mrf.mxu0
    %v1044 = vadd.f32 0.0, %v1043
    %1045 = vdwg.mxu0
    %v1046 = vadd.f32 %v206, %v1041
    %v1047 = vadd.f32 %v209, %v1044
    %v1048 = vxor.u32 %v1046, 2147483648
    %v1049 = vxor.u32 %v1047, 2147483648
    %v1050 = vmul.f32 %v1048, 1.442695
    %v1051 = vpow.pop %v1050
    %v1052 = vmul.f32 %v1049, 1.442695
    %v1053 = vpow.pop %v1052
    %v1054 = vadd.f32 %v1051, 1.0
    %v1055 = vadd.f32 %v1053, 1.0
    %v1056 = vrcp.pop %v1054
    %v1057 = vmul.f32 %v1054, %v1056
    %v1058 = vsub.f32 1.0, %v1057
    %v1059 = vmul.f32 %v1056, %v1058
    %v1060 = vadd.f32 %v1056, %v1059
    %vm1061 = vweird.f32 %v1054
    %vm1062 = vweird.f32 %v1056
    %vm1063 = vmor %vm1061, %vm1062
    %v1064 = vsel %vm1063, %v1056, %v1060
    %v1065 = vand.u32 2147483647, %v1054
    %vm1066 = vcmp.eq.f32.partialorder %v1065, 8.507059e+37
    %v1067 = vand.u32 %v1054, 2147483648
    %v1068 = vor.u32 1.1754944e-38, %v1067
    %v1069 = vsel %vm1066, %v1068, %v1064
    %v1070 = vmul.f32 1.0, %v1069
    %v1071 = vrcp.pop %v1055
    %v1072 = vmul.f32 %v1055, %v1071
    %v1073 = vsub.f32 1.0, %v1072
    %v1074 = vmul.f32 %v1071, %v1073
    %v1075 = vadd.f32 %v1071, %v1074
    %vm1076 = vweird.f32 %v1055
    %vm1077 = vweird.f32 %v1071
    %vm1078 = vmor %vm1076, %vm1077
    %v1079 = vsel %vm1078, %v1071, %v1075
    %v1080 = vand.u32 2147483647, %v1055
    %vm1081 = vcmp.eq.f32.partialorder %v1080, 8.507059e+37
    %v1082 = vand.u32 %v1055, 2147483648
    %v1083 = vor.u32 1.1754944e-38, %v1082
    %v1084 = vsel %vm1081, %v1083, %v1079
    %v1085 = vmul.f32 1.0, %v1084
    %v1086 = vadd.f32 %v1041, %v279
    %v1087 = vadd.f32 %v1044, %v279
    %1090 = vrot.lane.b32.xlu0 %v1086, 64
    %v1091 = vpop.permute.xlu0 %1090
    %1092 = vrot.lane.b32.xlu0 %v1087, 64
    %v1093 = vpop.permute.xlu0 %1092
    %v1096 = vmul.f32 %v1070, %v1091
    %v1097 = vmul.f32 %v1085, %v1093
    %1100 = vrot.lane.b32.xlu0 %v1096, 64
    %v1101 = vpop.permute.xlu0 %1100
    %1102 = vrot.lane.b32.xlu0 %v1097, 64
    %v1103 = vpop.permute.xlu0 %1102
    %v1106 = vadd.f32 %v206, %v1101
    %v1107 = vadd.f32 %v209, %v1103
    %v1108 = vtanh.pop %v1106
    %v1109 = vtanh.pop %v1107
    %v1110 = vsub.f32 1.0, %v1070
    %v1111 = vsub.f32 1.0, %v1085
    %1114 = vrot.lane.b32.xlu0 %v1108, 96
    %v1115 = vpop.permute.xlu0 %1114
    %1116 = vrot.lane.b32.xlu0 %v1109, 96
    %v1117 = vpop.permute.xlu0 %1116
    %v1120 = vmul.f32 %v1110, %v1115
    %v1121 = vmul.f32 %v1111, %v1117
    %v1122 = vmul.f32 %v1070, %v1009
    %v1123 = vmul.f32 %v1085, %v1010
    %v1124 = vadd.f32 %v1120, %v1122
    %v1125 = vadd.f32 %v1121, %v1123
    %v1126 = vadd.f32 %v1011, %v1124
    %v1127 = vadd.f32 %v1012, %v1125
    %v1128 = vmul.f32 %v1126, 0.125
    %v1129 = vmul.f32 %v1127, 0.125
    %1132 = vrot.lane.b32.xlu0 %v1128, 96
    %v1133 = vpop.permute.xlu0 %1132
    %1134 = vrot.lane.b32.xlu0 %v1129, 96
    %v1135 = vpop.permute.xlu0 %1134
    %1138 = vst.msk [vmem:[#allocation8] sm:$0xff] %vm211, %v1133
    %1139 = vst.msk [vmem:[#allocation8 + $0x8] sm:$0xff] %vm211, %v1135
    // Predicated region
    $region34: #{tpu_custom_call.1} parent=1 // pred_check
      _
    $region35: #{tpu_custom_call.1} parent=1 // pred_check_branch
      %1141 = sbr.rel (0) target = $region37
    $region36: #{tpu_custom_call.1} parent=1 // pred_region
      %1143 = vsyncadd [#allocation4], 0
      %s1144 = sshll.u32 [#allocation8], 4
      %s1145 = int_to_ptr.vmem [resolvable:$true] %s1144
      %s1146 = sshll.u32 %s5, 4
      %s1147 = int_to_ptr.hbm [resolvable:$true] %s1146
      %1152 = dma.vmem_to_hbm [thread:$0]  %s1145, 256, %s1147, [#allocation4], 128, 128, 8
    $region37: #{tpu_custom_call.1} parent=1 // pred_fallthru
      _
    // Predicated region
    $region38: #{tpu_custom_call.1} parent=1 // pred_check
      _
    $region39: #{tpu_custom_call.1} parent=1 // pred_check_branch
      %1154 = sbr.rel (0) target = $region41
    $region40: #{tpu_custom_call.1} parent=1 // pred_region
      %1156 = dma.done [#allocation4], 256
    $region41: #{tpu_custom_call.1} parent=1 // pred_fallthru
      _
    %1157 = vsyncpa [#allocation3], 1
    %1158 = vsyncpa [#allocation6], 1
    %1159 = vsyncpa [#allocation4], 1

</llo_original>
